<compile_context>
chip_gen: v5e
topology: v5e:2x2
jax: 0.10.0
libtpu: 0.0.40
codegen_flags: <defaults>
</compile_context>

<pallas_src>
import functools

import jax
import jax.numpy as jnp
from jax.experimental import pallas as pl
from jax.experimental.pallas import tpu as pltpu


def _conv1x1_kernel(x_ref, w_ref, b_ref, o_ref):
    # x_ref: (Cin, T)  w_ref: (tco, Cin)  b_ref: (tco, 1)  o_ref: (tco, T)
    acc = jnp.dot(w_ref[...], x_ref[...], preferred_element_type=jnp.float32)
    o_ref[...] = (acc + b_ref[...]).astype(o_ref.dtype)


def _pick_tiles(hw, cin, cout, itemsize, n_images):
    """Pick (spatial_tile, cout_tile): lane-dense, VMEM-budgeted, >=2 grid steps."""
    # Output-channel tile: full if small, else 512 (multiple of 8, cdiv tail ok).
    tco = cout if cout <= 512 else 512

    if hw <= 256:
        return hw, tco                       # single spatial block (full extent)

    budget = 24 * 1024 * 1024                # leave headroom under 32 MiB scoped VMEM
    fixed = 2 * (tco * cin + tco) * itemsize           # double-buffered weight + bias
    per_col = 2 * (cin + tco) * itemsize               # double-buffered x col + out col
    max_t = max(128, ((budget - fixed) // per_col) // 128 * 128)

    t = min(2048, max_t, (hw // 128) * 128)  # lane-dense multiple of 128
    t = max(t, 128)
    for cand in range(t, 127, -128):         # prefer an exact divisor (no masked tail)
        if hw % cand == 0:
            t = cand
            break
    # keep at least 2 total grid steps so a megacore can split the work
    total = n_images * pl.cdiv(hw, t) * pl.cdiv(cout, tco)
    if total < 2 and t >= 256:
        t = (t // 2) // 128 * 128
    return t, tco


@functools.partial(jax.jit, static_argnames=("factor",))
def upsample_forward(x, weight, bias, factor=2):
    """x: [N, C, H, W] (NCHW, like PyTorch). weight: [Cout, Cin, 1, 1]. bias: [Cout]."""
    N, C, H, W = x.shape
    Cout = weight.shape[0]
    r = factor
    assert Cout == C * r * r

    HW = H * W
    x3d = x.reshape(N, C, HW)            # free: NCHW is contiguous
    w2d = weight[:, :, 0, 0]             # (Cout, Cin)
    b2d = bias.reshape(Cout, 1)          # broadcasts along lanes in-kernel

    itemsize = jnp.dtype(x.dtype).itemsize
    T, TCO = _pick_tiles(HW, C, Cout, itemsize, N)
    grid = (N, pl.cdiv(HW, T), pl.cdiv(Cout, TCO))   # x tile resident across inner co loop

    cost = pl.CostEstimate(
        flops=2 * N * HW * C * Cout,
        transcendentals=0,
        bytes_accessed=(N * HW * (C + Cout) + Cout * C + Cout) * itemsize,
    )

    y3d = pl.pallas_call(
        _conv1x1_kernel,
        out_shape=jax.ShapeDtypeStruct((N, Cout, HW), x.dtype),
        grid_spec=pltpu.PrefetchScalarGridSpec(
            num_scalar_prefetch=0,
            grid=grid,
            in_specs=[
                pl.BlockSpec((None, C, T), lambda n, t, co: (n, 0, t)),   # x tile
                pl.BlockSpec((TCO, C), lambda n, t, co: (co, 0)),          # weight tile
                pl.BlockSpec((TCO, 1), lambda n, t, co: (co, 0)),          # bias tile
            ],
            out_specs=pl.BlockSpec((None, TCO, T), lambda n, t, co: (n, co, t)),
        ),
        compiler_params=pltpu.CompilerParams(
            dimension_semantics=("parallel", "parallel", "parallel"),
            vmem_limit_bytes=32 * 1024 * 1024,
        ),
        cost_estimate=cost,
    )(x3d, w2d, b2d)

    # PixelShuffle: out[n, c, h*r + i, w*r + j] = conv[n, c*r*r + i*r + j, h, w]
    y = y3d.reshape(N, C, r, r, H, W)
    y = jnp.transpose(y, (0, 1, 4, 2, 5, 3))    # (N, C, H, r, W, r)
    return y.reshape(N, C, H * r, W * r)


def _reference_forward(x, weight, bias, factor=2):
    """Pure-JAX reference mirroring the PyTorch module exactly."""
    N, C, H, W = x.shape
    r = factor
    feat = jnp.einsum("nchw,oc->nohw", x, weight[:, :, 0, 0]) + bias[None, :, None, None]
    feat = feat.reshape(N, C, r, r, H, W)
    feat = jnp.transpose(feat, (0, 1, 4, 2, 5, 3))
    return feat.reshape(N, C, H * r, W * r)


def init_params(key, n_chan, factor=2, dtype=jnp.float32):
    out_chan = n_chan * factor * factor
    kw, kb = jax.random.split(key)
    # xavier_normal_(gain=1.0): std = sqrt(2 / (fan_in + fan_out)) for 1x1 kernels
    fan_in = n_chan
    fan_out = out_chan
    std = (2.0 / (fan_in + fan_out)) ** 0.5
    weight = std * jax.random.normal(kw, (out_chan, n_chan, 1, 1), dtype=dtype)
    # Conv2d default bias init: U(-1/sqrt(fan_in), 1/sqrt(fan_in))
    bound = 1.0 / (fan_in ** 0.5)
    bias = jax.random.uniform(kb, (out_chan,), dtype=dtype, minval=-bound, maxval=bound)
    return weight, bias


if __name__ == "__main__":
    key = jax.random.PRNGKey(0)
    kx, kp = jax.random.split(key)

    N, C, H, W = 2, 4, 16, 16
    factor = 2
    x = jax.random.normal(kx, (N, C, H, W), dtype=jnp.float32)
    weight, bias = init_params(kp, C, factor=factor)

    out = upsample_forward(x, weight, bias, factor=factor)
    out = jax.block_until_ready(out)

    ref = _reference_forward(x, weight, bias, factor=factor)
    assert out.shape == (N, C, H * factor, W * factor), out.shape
    assert jnp.allclose(out, ref, atol=1e-5, rtol=1e-5), "mismatch vs reference"

    print("KERNEL_OK")
</pallas_src>

<mosaic_0001>
module attributes {stable_mosaic.version = 11 : i64} {
  func.func @_conv1x1_kernel(%arg0: i32, %arg1: i32, %arg2: i32, %arg3: memref<1x4x256xf32, #tpu.memory_space<vmem>>, %arg4: memref<16x4xf32, #tpu.memory_space<vmem>>, %arg5: memref<16x1xf32, #tpu.memory_space<vmem>>, %arg6: memref<1x16x256xf32, #tpu.memory_space<vmem>>) attributes {dimension_semantics = [#tpu.dimension_semantics<parallel>, #tpu.dimension_semantics<parallel>, #tpu.dimension_semantics<parallel>], iteration_bounds = array<i64: 2, 1, 1>, scalar_prefetch = 0 : i64, scratch_operands = 0 : i64, tpu.core_type = #tpu.core_type<tc>, window_params = [{transform_indices = @transform_0, window_bounds = array<i64: 1, 4, 256>}, {transform_indices = @transform_1, window_bounds = array<i64: 16, 4>}, {transform_indices = @transform_2, window_bounds = array<i64: 16, 1>}, {transform_indices = @transform_3, window_bounds = array<i64: 1, 16, 256>}]} {
    %c0 = arith.constant 0 : index
    %c0_0 = arith.constant 0 : index
    %0 = vector.load %arg4[%c0, %c0_0] : memref<16x4xf32, #tpu.memory_space<vmem>>, vector<16x4xf32>
    %c0_1 = arith.constant 0 : index
    %c0_2 = arith.constant 0 : index
    %c0_3 = arith.constant 0 : index
    %1 = vector.load %arg3[%c0_1, %c0_2, %c0_3] : memref<1x4x256xf32, #tpu.memory_space<vmem>>, vector<1x4x256xf32>
    %2 = vector.shape_cast %1 : vector<1x4x256xf32> to vector<4x256xf32>
    %cst = arith.constant dense<0.000000e+00> : vector<16x256xf32>
    %3 = tpu.matmul %0, %2, %cst {dimension_numbers = #tpu.dot_dimension_numbers<[1], [0], [0], [1], [0, 0, 1, 1], [], []>} : vector<16x4xf32>, vector<4x256xf32>, vector<16x256xf32> -> vector<16x256xf32>
    %c0_4 = arith.constant 0 : index
    %c0_5 = arith.constant 0 : index
    %4 = vector.load %arg5[%c0_4, %c0_5] : memref<16x1xf32, #tpu.memory_space<vmem>>, vector<16x1xf32>
    %5 = vector.broadcast %4 : vector<16x1xf32> to vector<16x256xf32>
    %6 = arith.addf %3, %5 : vector<16x256xf32>
    %c0_6 = arith.constant 0 : index
    %c0_7 = arith.constant 0 : index
    %c0_8 = arith.constant 0 : index
    %7 = vector.load %arg6[%c0_6, %c0_7, %c0_8] : memref<1x16x256xf32, #tpu.memory_space<vmem>>, vector<1x16x256xf32>
    %8 = vector.shape_cast %7 : vector<1x16x256xf32> to vector<16x256xf32>
    %9 = vector.shape_cast %6 : vector<16x256xf32> to vector<1x16x256xf32>
    tpu.vector_store %arg6[%c0_6, %c0_7, %c0_8], %9 {strides = array<i32>} : memref<1x16x256xf32, #tpu.memory_space<vmem>>, vector<1x16x256xf32>,
    return
  }
  func.func @transform_0(%arg0: i32, %arg1: i32, %arg2: i32) -> (i32, i32, i32) {
    %c0_i32 = arith.constant 0 : i32
    %c0_i32_0 = arith.constant 0 : i32
    return %arg0, %c0_i32, %arg1 : i32, i32, i32
  }
  func.func @transform_1(%arg0: i32, %arg1: i32, %arg2: i32) -> (i32, i32) {
    %c0_i32 = arith.constant 0 : i32
    %c0_i32_0 = arith.constant 0 : i32
    return %arg2, %c0_i32 : i32, i32
  }
  func.func @transform_2(%arg0: i32, %arg1: i32, %arg2: i32) -> (i32, i32) {
    %c0_i32 = arith.constant 0 : i32
    %c0_i32_0 = arith.constant 0 : i32
    return %arg2, %c0_i32 : i32, i32
  }
  func.func @transform_3(%arg0: i32, %arg1: i32, %arg2: i32) -> (i32, i32, i32) {
    %c0_i32 = arith.constant 0 : i32
    return %arg0, %arg2, %arg1 : i32, i32, i32
  }
}

</mosaic_0001>

<llo_original>
// kernel: upsample_forward.1
$region0: #{upsample_forward.1}
  #allocation0 [shape = 'u32[]', space=smem, size = 0x4, offset = 0x4, fixed_abs, tag = 'smem constant byte address 0x4 - core index']
  #allocation1 [shape = 'u32[72,128]{1,0:T(1,128)}', space=vmem, size = 0x9000, scoped, tag = 'internal scratch']
  %s0 = inlined_call_operand.vmem [shape: f32[2,4,256], index: 0, kind: input, shape index: {}]
  %s1 = inlined_call_operand.vmem [shape: f32[16,4], index: 1, kind: input, shape index: {}]
  %s2 = inlined_call_operand.vmem [shape: f32[16,1], index: 2, kind: input, shape index: {}]
  %s3 = inlined_call_operand.vmem [shape: f32[2,16,256], index: 3, kind: output, shape index: {}]
  %s4 = sld [smem:[#allocation0]]
  $region45: #{upsample_forward.1} parent=0
    _
  %s6 = ssub.s32 1, %s4
  %s7 = scalar_select 0, %s6, %s4
  loop: start=0, step=1, limit=4
  $region2: #{upsample_forward.1} parent=0 // loop_pre_header
    _
  $region3: #{upsample_forward.1} parent=0 // loop_header
    %s9 = sphi 0, %s13
    %p10 = scmp.ge.s32.totalorder %s9, 4
    %s16 = sphi 0, %s35
    %s17 = sphi 0, %s31
    %s18 = sphi 0, %s27
    %s19 = sphi 0, %s16
    %s20 = sphi 0, %s17
    %s21 = sphi 0, %s18
    %s22 = sphi 0, %s19
    %s23 = sphi 0, %s20
    %s24 = sphi 0, %s21
    %s40 = sphi 0, %s42
    %s43 = sphi 0, %s40
    %s44 = sphi 0, %s43
    %s60 = sphi 0, %s44
    %s66 = sphi 0, %s68
    %s69 = sphi 0, %s66
    %s70 = sphi 0, %s69
    %s86 = sphi 0, %s70
    %s92 = sphi 0, %s94
    %s95 = sphi 0, %s92
    %s96 = sphi 0, %s95
    %s112 = sphi 0, %s96
    %s122 = sphi 0, %s124
    %s125 = sphi 0, %s122
    %s126 = sphi 0, %s125
    %s142 = sphi 0, %s126
  $region4: #{upsample_forward.1} parent=0 // loop_header_branch
    %12 = sbr.rel (%p10) target = $region8
  $region5: #{upsample_forward.1} parent=0 // loop_body
    %s14 = ssub.s32 %s9, 1
    %s15 = ssub.s32 %s9, 2
    %s25 = sadd.s32 1, %s18
    %p26 = scmp.ge.s32.totalorder %s25, 1
    %s27 = scalar_select %p26, 0, %s25
    %s28 = sadd.s32 1, %s17
    %s29 = scalar_select %p26, %s28, %s17
    %p30 = scmp.ge.s32.totalorder %s29, 1
    %s31 = scalar_select %p30, 0, %s29
    %s32 = sadd.s32 1, %s16
    %s33 = scalar_select %p30, %s32, %s16
    %p34 = scmp.ge.s32.totalorder %s33, 2
    %s35 = scalar_select %p34, 0, %s33
    %s36 = ssub.s32 %s16, %s35
    %s37 = ssub.s32 %s17, %s31
    %s38 = sor.u32 %s36, %s37
    %p39 = scmp.eq.s32.totalorder %s38, 0
    %s41 = sadd.s32 %s40, 1
    %s42 = scalar_select %p39, %s40, %s41
    %p45 = pneg %p39
    %p46 = scmp.eq.s32.totalorder %s9, 1
    %p47 = por %p45, %p46
    %p48 = scmp.ne.s32.totalorder %s40, %s43
    %p49 = scmp.eq.s32.totalorder %s9, 0
    %p50 = por %p48, %p49
    %p51 = scmp.ne.s32.totalorder %s40, %s43
    %p52 = scmp.eq.s32.totalorder %s14, 1
    %p53 = por %p51, %p52
    %p54 = scmp.ne.s32.totalorder %s43, %s44
    %p55 = scmp.eq.s32.totalorder %s14, 0
    %p56 = por %p54, %p55
    %p57 = scmp.ne.s32.totalorder %s43, %s44
    %p58 = scmp.eq.s32.totalorder %s15, 1
    %p59 = por %p57, %p58
    %p61 = scmp.ne.s32.totalorder %s44, %s60
    %p62 = scmp.eq.s32.totalorder %s15, 0
    %p63 = por %p61, %p62
    %s64 = ssub.s32 %s18, %s27
    %p65 = scmp.eq.s32.totalorder %s64, 0
    %s67 = sadd.s32 %s66, 1
    %s68 = scalar_select %p65, %s66, %s67
    %p71 = pneg %p65
    %p72 = scmp.eq.s32.totalorder %s9, 1
    %p73 = por %p71, %p72
    %p74 = scmp.ne.s32.totalorder %s66, %s69
    %p75 = scmp.eq.s32.totalorder %s9, 0
    %p76 = por %p74, %p75
    %p77 = scmp.ne.s32.totalorder %s66, %s69
    %p78 = scmp.eq.s32.totalorder %s14, 1
    %p79 = por %p77, %p78
    %p80 = scmp.ne.s32.totalorder %s69, %s70
    %p81 = scmp.eq.s32.totalorder %s14, 0
    %p82 = por %p80, %p81
    %p83 = scmp.ne.s32.totalorder %s69, %s70
    %p84 = scmp.eq.s32.totalorder %s15, 1
    %p85 = por %p83, %p84
    %p87 = scmp.ne.s32.totalorder %s70, %s86
    %p88 = scmp.eq.s32.totalorder %s15, 0
    %p89 = por %p87, %p88
    %s90 = ssub.s32 %s18, %s27
    %p91 = scmp.eq.s32.totalorder %s90, 0
    %s93 = sadd.s32 %s92, 1
    %s94 = scalar_select %p91, %s92, %s93
    %p97 = pneg %p91
    %p98 = scmp.eq.s32.totalorder %s9, 1
    %p99 = por %p97, %p98
    %p100 = scmp.ne.s32.totalorder %s92, %s95
    %p101 = scmp.eq.s32.totalorder %s9, 0
    %p102 = por %p100, %p101
    %p103 = scmp.ne.s32.totalorder %s92, %s95
    %p104 = scmp.eq.s32.totalorder %s14, 1
    %p105 = por %p103, %p104
    %p106 = scmp.ne.s32.totalorder %s95, %s96
    %p107 = scmp.eq.s32.totalorder %s14, 0
    %p108 = por %p106, %p107
    %p109 = scmp.ne.s32.totalorder %s95, %s96
    %p110 = scmp.eq.s32.totalorder %s15, 1
    %p111 = por %p109, %p110
    %p113 = scmp.ne.s32.totalorder %s96, %s112
    %p114 = scmp.eq.s32.totalorder %s15, 0
    %p115 = por %p113, %p114
    %s116 = ssub.s32 %s16, %s35
    %s117 = ssub.s32 %s18, %s27
    %s118 = sor.u32 %s116, %s117
    %s119 = ssub.s32 %s17, %s31
    %s120 = sor.u32 %s118, %s119
    %p121 = scmp.eq.s32.totalorder %s120, 0
    %s123 = sadd.s32 %s122, 1
    %s124 = scalar_select %p121, %s122, %s123
    %p127 = pneg %p121
    %p128 = scmp.eq.s32.totalorder %s9, 1
    %p129 = por %p127, %p128
    %p130 = scmp.ne.s32.totalorder %s122, %s125
    %p131 = scmp.eq.s32.totalorder %s9, 0
    %p132 = por %p130, %p131
    %p133 = scmp.ne.s32.totalorder %s122, %s125
    %p134 = scmp.eq.s32.totalorder %s14, 1
    %p135 = por %p133, %p134
    %p136 = scmp.ne.s32.totalorder %s125, %s126
    %p137 = scmp.eq.s32.totalorder %s14, 0
    %p138 = por %p136, %p137
    %p139 = scmp.ne.s32.totalorder %s125, %s126
    %p140 = scmp.eq.s32.totalorder %s15, 1
    %p141 = por %p139, %p140
    %p143 = scmp.ne.s32.totalorder %s126, %s142
    %p144 = scmp.eq.s32.totalorder %s15, 0
    %p145 = por %p143, %p144
    %p146 = scmp.le.s32.totalorder 1, %s9
    %p147 = scmp.lt.s32.totalorder %s9, 3
    %p148 = pnand %p146, %p147
    %p149 = pneg %p148
    // Predicated region
    $region9: #{upsample_forward.1} parent=5 // pred_check
      _
    $region10: #{upsample_forward.1} parent=5 // pred_check_branch
      %151 = sbr.rel (%p148) target = $region12
    $region11: #{upsample_forward.1} parent=5 // pred_region
      %s152 = ssub.s32 %s9, 1
      // Predicated region
      $region13: #{upsample_forward.1} parent=11 // pred_check
        %p153 = pneg %p82
      $region14: #{upsample_forward.1} parent=11 // pred_check_branch
        %155 = sbr.rel (%p153) target = $region16
      $region15: #{upsample_forward.1} parent=11 // pred_region
        %s156 = smul.u32 2, %s21
        %p157 = scmp.lt.s32.totalorder %s156, 1
        %s158 = scalar_select %p157, %s156, 1
        %s159 = smul.addr %s158, 8
        %s160 = scalar_lea.vmem %s1, %s159
        %s161 = smul.u32 2, %s21
      $region16: #{upsample_forward.1} parent=11 // pred_fallthru
        _
      // Predicated region
      $region17: #{upsample_forward.1} parent=11 // pred_check
        %p162 = pneg %p108
      $region18: #{upsample_forward.1} parent=11 // pred_check_branch
        %164 = sbr.rel (%p162) target = $region20
      $region19: #{upsample_forward.1} parent=11 // pred_region
        %s165 = smul.u32 2, %s21
        %p166 = scmp.lt.s32.totalorder %s165, 1
        %s167 = scalar_select %p166, %s165, 1
        %s168 = smul.addr %s167, 8
        %s169 = scalar_lea.vmem %s2, %s168
        %s170 = smul.u32 2, %s21
      $region20: #{upsample_forward.1} parent=11 // pred_fallthru
        _
    $region12: #{upsample_forward.1} parent=5 // pred_fallthru
      _
    %p171 = scmp.lt.s32.totalorder %s9, 2
    // Predicated region
    $region21: #{upsample_forward.1} parent=5 // pred_check
      %p172 = pneg %p171
    $region22: #{upsample_forward.1} parent=5 // pred_check_branch
      %174 = sbr.rel (%p172) target = $region24
    $region23: #{upsample_forward.1} parent=5 // pred_region
      // Predicated region
      $region25: #{upsample_forward.1} parent=23 // pred_check
        %p175 = pneg %p50
      $region26: #{upsample_forward.1} parent=23 // pred_check_branch
        %177 = sbr.rel (%p175) target = $region28
      $region27: #{upsample_forward.1} parent=23 // pred_region
        %s178 = smul.u32 2, %s17
        %p179 = scmp.lt.s32.totalorder %s16, 1
        %s180 = scalar_select %p179, %s16, 1
        %p181 = scmp.lt.s32.totalorder %s178, 1
        %s182 = scalar_select %p181, %s178, 1
        %s183 = smul.addr %s180, 2
        %s184 = sadd.s32 %s182, %s183
        %s185 = smul.addr %s184, 4
        %s186 = scalar_lea.vmem %s0, %s185
        %s187 = smul.u32 2, %s17
      $region28: #{upsample_forward.1} parent=23 // pred_fallthru
        _
    $region24: #{upsample_forward.1} parent=5 // pred_fallthru
      _
    %p188 = scmp.le.s32.totalorder 1, %s9
    %p189 = scmp.lt.s32.totalorder %s9, 3
    %p190 = pnand %p188, %p189
    %p191 = pneg %p190
    // Predicated region
    $region29: #{upsample_forward.1} parent=5 // pred_check
      _
    $region30: #{upsample_forward.1} parent=5 // pred_check_branch
      %193 = sbr.rel (%p190) target = $region32
    $region31: #{upsample_forward.1} parent=5 // pred_region
      %s194 = ssub.s32 %s9, 1
      %s195 = smul.u32 2, %s20
      %p196 = scmp.lt.s32.totalorder %s19, 1
      %s197 = scalar_select %p196, %s19, 1
      %p198 = scmp.lt.s32.totalorder %s195, 1
      %s199 = scalar_select %p198, %s195, 1
      %s200 = smul.addr %s197, 2
      %s201 = sadd.s32 %s199, %s200
      %s202 = smul.addr %s201, 4
      %s203 = scalar_lea.vmem %s0, %s202
      %p204 = pneg %p56
      %p205 = pneg %p53
      %s206 = smul.u32 2, %s21
      %p207 = scmp.lt.s32.totalorder %s206, 1
      %s208 = scalar_select %p207, %s206, 1
      %s209 = smul.addr %s208, 8
      %s210 = scalar_lea.vmem %s1, %s209
      %p211 = pneg %p82
      %p212 = pneg %p79
      %s213 = smul.u32 2, %s21
      %p214 = scmp.lt.s32.totalorder %s213, 1
      %s215 = scalar_select %p214, %s213, 1
      %s216 = smul.addr %s215, 8
      %s217 = scalar_lea.vmem %s2, %s216
      %p218 = pneg %p108
      %p219 = pneg %p105
      %p220 = pneg %p138
      %p221 = pneg %p135
      %s222 = smul.u32 2, %s21
      %s223 = smul.u32 2, %s20
      %p224 = scmp.lt.s32.totalorder %s19, 1
      %s225 = scalar_select %p224, %s19, 1
      %p226 = scmp.lt.s32.totalorder %s222, 1
      %s227 = scalar_select %p226, %s222, 1
      %p228 = scmp.lt.s32.totalorder %s223, 1
      %s229 = scalar_select %p228, %s223, 1
      %s230 = smul.addr %s227, 2
      %s231 = sadd.s32 %s229, %s230
      %s232 = smul.addr %s225, 4
      %s233 = sadd.s32 %s231, %s232
      %s234 = smul.addr %s233, 8
      %s235 = scalar_lea.vmem %s3, %s234
      %s236 = smul.u32 2, %s20
      %p237 = scmp.lt.s32.totalorder %s19, 1
      %s238 = scalar_select %p237, %s19, 1
      %p239 = scmp.lt.s32.totalorder %s236, 1
      %s240 = scalar_select %p239, %s236, 1
      %s241 = smul.addr %s238, 2
      %s242 = sadd.s32 %s240, %s241
      %s243 = smul.addr %s242, 4
      %s244 = scalar_lea.vmem %s0, %s243
      %s245 = smul.u32 2, %s20
      %s246 = smul.u32 2, %s21
      %p247 = scmp.lt.s32.totalorder %s246, 1
      %s248 = scalar_select %p247, %s246, 1
      %s249 = smul.addr %s248, 8
      %s250 = scalar_lea.vmem %s1, %s249
      %s251 = smul.u32 2, %s21
      %s252 = smul.u32 2, %s21
      %p253 = scmp.lt.s32.totalorder %s252, 1
      %s254 = scalar_select %p253, %s252, 1
      %s255 = smul.addr %s254, 8
      %s256 = scalar_lea.vmem %s2, %s255
      %s257 = smul.u32 2, %s21
      %s258 = smul.u32 2, %s21
      %s259 = smul.u32 2, %s20
      %p260 = scmp.lt.s32.totalorder %s19, 1
      %s261 = scalar_select %p260, %s19, 1
      %p262 = scmp.lt.s32.totalorder %s258, 1
      %s263 = scalar_select %p262, %s258, 1
      %p264 = scmp.lt.s32.totalorder %s259, 1
      %s265 = scalar_select %p264, %s259, 1
      %s266 = smul.addr %s263, 2
      %s267 = sadd.s32 %s265, %s266
      %s268 = smul.addr %s261, 4
      %s269 = sadd.s32 %s267, %s268
      %s270 = smul.addr %s269, 8
      %s271 = scalar_lea.vmem %s3, %s270
      %s272 = smul.u32 2, %s21
      %s273 = smul.u32 2, %s20
      %v274 = vld [vmem:[%s250] sm:$0xff]
      %v275 = vld [vmem:[%s250 + $0x8] sm:$0xff]
      %v276 = vld [vmem:[%s244] sm:$0xff]
      %v277 = vld [vmem:[%s256] sm:$0xff]
      %v278 = vld [vmem:[%s256 + $0x8] sm:$0xff]
      %280 = vset.pattern.permute.xlu0 0
      %281 = vperm.xlu0 %280, %v277
      %v282 = vpop.permute.xlu0 %281
      %285 = vset.pattern.permute.xlu0 0
      %286 = vperm.xlu0 %285, %v278
      %v287 = vpop.permute.xlu0 %286
      %290 = vst [vmem:[#allocation1] ss:$2 sm:$0xff] %v276
      %v291 = vld.sshfl [vmem:[#allocation1] sm:$0xff pattern:$0x75316420]
      %v292 = vld.sshfl [vmem:[#allocation1 + $0x8] sm:$0xff pattern:$0x75316420]
      %vm293 = vcmask 31744
      %v295 = vsel %vm293, %v274, 0
      %v298 = vsel %vm293, %v275, 0
      %vm300 = vcmask 1043456
      %v301 = vsel %vm300, %v291, 0
      %v303 = vsel %vm300, %v292, 0
      %305 = vmatpush.msra.mxu0 0.0
      %306 = vmatpush.msra.mxu0 0.0
      %307 = vmatpush.msra.mxu0 0.0
      %308 = vmatpush.msra.mxu0 0.0
      %309 = vmatpush.msra.mxu0 0.0
      %310 = vmatpush.msra.mxu0 0.0
      %311 = vmatpush.msra.mxu0 0.0
      %312 = vmatpush.msra.mxu0 0.0
      %313 = vmatpush.msra.mxu0 0.0
      %314 = vmatpush.msra.mxu0 0.0
      %315 = vmatpush.msra.mxu0 0.0
      %316 = vmatpush.msra.mxu0 0.0
      %317 = vmatpush.msra.mxu0 0.0
      %318 = vmatpush.msra.mxu0 0.0
      %319 = vmatpush.msra.mxu0 0.0
      %320 = vmatpush.msra.mxu0 %v301
      %321 = vmatmul.f32.gmra.mxu0 %v295
      %v322 = vpop.f32.mrf.mxu0
      %v323 = vadd.f32 %v282, %v322
      %324 = vmatmul.f32.gmra.mxu0 %v298
      %v325 = vpop.f32.mrf.mxu0
      %v326 = vadd.f32 %v287, %v325
      %327 = vdwg.mxu0
      %328 = vmatpush.msra.mxu0 0.0
      %329 = vmatpush.msra.mxu0 0.0
      %330 = vmatpush.msra.mxu0 0.0
      %331 = vmatpush.msra.mxu0 0.0
      %332 = vmatpush.msra.mxu0 0.0
      %333 = vmatpush.msra.mxu0 0.0
      %334 = vmatpush.msra.mxu0 0.0
      %335 = vmatpush.msra.mxu0 0.0
      %336 = vmatpush.msra.mxu0 0.0
      %337 = vmatpush.msra.mxu0 0.0
      %338 = vmatpush.msra.mxu0 0.0
      %339 = vmatpush.msra.mxu0 0.0
      %340 = vmatpush.msra.mxu0 0.0
      %341 = vmatpush.msra.mxu0 0.0
      %342 = vmatpush.msra.mxu0 0.0
      %343 = vmatpush.msra.mxu0 %v303
      %344 = vmatmul.f32.gmra.mxu0 %v295
      %v345 = vpop.f32.mrf.mxu0
      %v346 = vadd.f32 %v282, %v345
      %347 = vmatmul.f32.gmra.mxu0 %v298
      %v348 = vpop.f32.mrf.mxu0
      %v349 = vadd.f32 %v287, %v348
      %350 = vdwg.mxu0
      %351 = vst [vmem:[%s271] sm:$0xff] %v323
      %352 = vst [vmem:[%s271 + $0x8] sm:$0xff] %v346
      %353 = vst [vmem:[%s271 + $0x10] sm:$0xff] %v326
      %354 = vst [vmem:[%s271 + $0x18] sm:$0xff] %v349
      %s355 = smul.u32 2, %s21
      %s356 = smul.u32 2, %s20
      %p357 = scmp.lt.s32.totalorder %s19, 1
      %s358 = scalar_select %p357, %s19, 1
      %p359 = scmp.lt.s32.totalorder %s355, 1
      %s360 = scalar_select %p359, %s355, 1
      %p361 = scmp.lt.s32.totalorder %s356, 1
      %s362 = scalar_select %p361, %s356, 1
      %s363 = smul.addr %s360, 2
      %s364 = sadd.s32 %s362, %s363
      %s365 = smul.addr %s358, 4
      %s366 = sadd.s32 %s364, %s365
      %s367 = smul.addr %s366, 8
      %s368 = scalar_lea.vmem %s3, %s367
      // Predicated region
      $region33: #{upsample_forward.1} parent=31 // pred_check
        %p369 = pneg %p135
      $region34: #{upsample_forward.1} parent=31 // pred_check_branch
        %371 = sbr.rel (%p369) target = $region36
      $region35: #{upsample_forward.1} parent=31 // pred_region
        %s372 = smul.u32 2, %s21
        %s373 = smul.u32 2, %s20
      $region36: #{upsample_forward.1} parent=31 // pred_fallthru
        _
    $region32: #{upsample_forward.1} parent=5 // pred_fallthru
      _
    %p374 = scmp.le.s32.totalorder 2, %s9
    // Predicated region
    $region37: #{upsample_forward.1} parent=5 // pred_check
      %p375 = pneg %p374
    $region38: #{upsample_forward.1} parent=5 // pred_check_branch
      %377 = sbr.rel (%p375) target = $region40
    $region39: #{upsample_forward.1} parent=5 // pred_region
      %s378 = ssub.s32 %s9, 2
      // Predicated region
      $region41: #{upsample_forward.1} parent=39 // pred_check
        %p379 = pneg %p141
      $region42: #{upsample_forward.1} parent=39 // pred_check_branch
        %381 = sbr.rel (%p379) target = $region44
      $region43: #{upsample_forward.1} parent=39 // pred_region
        %s382 = smul.u32 2, %s24
        %s383 = smul.u32 2, %s23
        %p384 = scmp.lt.s32.totalorder %s22, 1
        %s385 = scalar_select %p384, %s22, 1
        %p386 = scmp.lt.s32.totalorder %s382, 1
        %s387 = scalar_select %p386, %s382, 1
        %p388 = scmp.lt.s32.totalorder %s383, 1
        %s389 = scalar_select %p388, %s383, 1
        %s390 = smul.addr %s387, 2
        %s391 = sadd.s32 %s389, %s390
        %s392 = smul.addr %s385, 4
        %s393 = sadd.s32 %s391, %s392
        %s394 = smul.addr %s393, 8
        %s395 = scalar_lea.vmem %s3, %s394
      $region44: #{upsample_forward.1} parent=39 // pred_fallthru
        _
    $region40: #{upsample_forward.1} parent=5 // pred_fallthru
      _
  $region6: #{upsample_forward.1} parent=0 // loop_footer
    %s13 = sadd.s32 1, %s9
  $region7: #{upsample_forward.1} parent=0 // loop_footer_branch
    %8 = sbr.rel target = $region3
  $region8: #{upsample_forward.1} parent=0 // loop_exit
    _

</llo_original>
